<compile_context>
chip_gen: v6e
topology: v6e:2x2x1
jax: 0.10.0
libtpu: 0.0.40
codegen_flags: <defaults>
</compile_context>

<pallas_src>
import jax
import jax.numpy as jnp
from jax import lax
from jax.experimental import pallas as pl
from jax.experimental.pallas import tpu as pltpu


def _round_up(x, m):
    return ((x + m - 1) // m) * m


def _linear_point_kernel(x_ref, w_ref, b_ref, o_ref):
    # x_ref: (tm, C) row tile; w_ref: (num_classes, C) full weight (resident);
    # b_ref: (1, num_classes) f32 bias (resident); o_ref: (tm, num_classes).
    acc = lax.dot_general(
        x_ref[...], w_ref[...],
        dimension_numbers=(((1,), (1,)), ((), ())),   # x @ w.T on the MXU
        preferred_element_type=jnp.float32)
    # f32 epilogue (bias broadcast-add); cast only at the final store.
    o_ref[...] = (acc + b_ref[...]).astype(o_ref.dtype)


def _hw_profile():
    """Return (vmem_budget_bytes, vmem_limit_bytes, want_even_multi_step)."""
    kind = ""
    try:
        kind = (jax.devices()[0].device_kind or "").lower()
    except Exception:
        pass
    is_v7 = ("v7" in kind) or ("7x" in kind)
    if is_v7:
        # v7x: 64 MiB physical VMEM per TC, 2 TCs per chip -> keep the
        # double-buffered tiles well under the limit and shard rows evenly.
        return 24 << 20, 32 << 20, True
    # v5e / v6e: single TensorCore, 128 MiB physical VMEM -> one big tile.
    return 64 << 20, 80 << 20, False


def _choose_tm(M, C, NC, itemsize, vmem_budget, even_steps, sublane):
    """Row tile size from a VMEM budget; dtype-aware sublane rounding."""
    # Weight + bias are resident but conservatively counted double-buffered.
    fixed = 2 * (NC * C * itemsize + NC * 4)
    # Double-buffered x tile + output tile per row.
    per_row = 2 * (C + NC) * itemsize
    tm_cap = (vmem_budget - fixed) // max(per_row, 1)
    tm_cap = max(sublane, min((tm_cap // sublane) * sublane, 1 << 16))
    if not even_steps:
        # Single-TC chip: fewest possible steps (one step for small/medium M).
        return max(sublane, min(tm_cap, _round_up(M, sublane)))
    # v7x megacore: aim for an even number of grid steps so both TCs get
    # equal work, while staying within the VMEM-derived cap.
    steps = max(2, pl.cdiv(M, tm_cap))
    if steps % 2:
        steps += 1
    tm = _round_up(pl.cdiv(M, steps), sublane)
    return max(sublane, min(tm, tm_cap))


def linear_point_pallas(x_flat, w, b_f32, *, tm=None):
    """y = x_flat @ w.T + b, tiled over rows; returns (M, num_classes)."""
    M, C = x_flat.shape
    NC = w.shape[0]
    itemsize = jnp.dtype(x_flat.dtype).itemsize
    sublane = {4: 8, 2: 16, 1: 32}.get(itemsize, 8)

    vmem_budget, vmem_limit, even_steps = _hw_profile()
    if tm is None:
        tm = _choose_tm(M, C, NC, itemsize, vmem_budget, even_steps, sublane)

    num_steps = pl.cdiv(M, tm)   # partial last block handled by Pallas

    cost = pl.CostEstimate(
        flops=2 * M * C * NC,
        transcendentals=0,
        bytes_accessed=itemsize * (M * C + NC * C) + 4 * NC
                       + itemsize * M * NC,
    )

    return pl.pallas_call(
        _linear_point_kernel,
        out_shape=jax.ShapeDtypeStruct((M, NC), x_flat.dtype),
        grid_spec=pltpu.PrefetchScalarGridSpec(
            num_scalar_prefetch=0,
            grid=(num_steps,),
            in_specs=[
                pl.BlockSpec((tm, C), lambda i: (i, 0)),      # row tile
                pl.BlockSpec((NC, C), lambda i: (0, 0)),      # full weight (resident)
                pl.BlockSpec((1, NC), lambda i: (0, 0)),      # full f32 bias (resident)
            ],
            out_specs=pl.BlockSpec((tm, NC), lambda i: (i, 0)),
        ),
        compiler_params=pltpu.CompilerParams(
            dimension_semantics=("parallel",),
            vmem_limit_bytes=vmem_limit,
        ),
        cost_estimate=cost,
    )(x_flat, w, b_f32)


class L2GClassifier3DParams:
    """Deterministic parameter init mirroring the PyTorch module shapes."""

    def __init__(self, key, input_channels, num_classes, dtype=jnp.float32):
        k1, k2, k3, k4 = jax.random.split(key, 4)
        bound = 1.0 / jnp.sqrt(jnp.asarray(input_channels, dtype))
        self.num_classes = num_classes
        # linear_point (used in forward)
        self.w_point = jax.random.uniform(
            k1, (num_classes, input_channels), dtype, -bound, bound)
        self.b_point = jax.random.uniform(
            k2, (num_classes,), dtype, -bound, bound)
        # linear_global (declared in __init__, unused in forward)
        self.w_global = jax.random.uniform(
            k3, (num_classes, input_channels), dtype, -bound, bound)
        self.b_global = jax.random.uniform(
            k4, (num_classes,), dtype, -bound, bound)
        # self.dow = AvgPool1d(kernel_size=3, stride=1, padding=1): no params.
        # TODO(synk): linear_global and dow are never executed in forward; only
        # linear_point is lowered to a Pallas kernel.

        # Pre-cast bias to f32 once so the kernel epilogue adds it directly to
        # the f32 accumulator with no per-step cast.
        self.b_point_f32 = self.b_point.astype(jnp.float32).reshape(1, num_classes)


def l2g_classifier_3d_forward(params, input_3d_feature):
    """Pallas-backed equivalent of L2G_classifier_3D.forward."""
    x = input_3d_feature
    orig_shape = x.shape
    C = orig_shape[-1]
    x_flat = x.reshape(-1, C)
    y_flat = linear_point_pallas(x_flat, params.w_point, params.b_point_f32)
    point_wise_pre = y_flat.reshape(*orig_shape[:-1], params.num_classes)
    preds = {"feats": x, "seg_logit_point": point_wise_pre}
    return preds


if __name__ == "__main__":
    key = jax.random.PRNGKey(0)
    k_param, k_x = jax.random.split(key)

    # Small shapes; batch*num_points = 120 is not a multiple of a typical row
    # tile, exercising the Pallas partial-last-block path (no wrapper padding).
    batch, num_points, input_channels, num_classes = 2, 60, 32, 16
    params = L2GClassifier3DParams(k_param, input_channels, num_classes)

    x = jax.random.normal(k_x, (batch, num_points, input_channels), jnp.float32)

    preds = l2g_classifier_3d_forward(params, x)
    jax.block_until_ready(preds)

    # Cross-check against plain-JAX reference of the PyTorch math.
    ref = x @ params.w_point.T + params.b_point
    assert preds["seg_logit_point"].shape == (batch, num_points, num_classes)
    assert preds["feats"].shape == x.shape
    assert jnp.allclose(preds["seg_logit_point"], ref, atol=1e-5, rtol=1e-5)
    assert jnp.array_equal(preds["feats"], x)

    print("KERNEL_OK")
</pallas_src>

<mosaic_0001>
module attributes {stable_mosaic.version = 11 : i64} {
  func.func @_linear_point_kernel(%arg0: i32, %arg1: memref<120x32xf32, #tpu.memory_space<vmem>>, %arg2: memref<16x32xf32, #tpu.memory_space<vmem>>, %arg3: memref<1x16xf32, #tpu.memory_space<vmem>>, %arg4: memref<120x16xf32, #tpu.memory_space<vmem>>) attributes {dimension_semantics = [#tpu.dimension_semantics<parallel>], iteration_bounds = array<i64: 1>, scalar_prefetch = 0 : i64, scratch_operands = 0 : i64, tpu.core_type = #tpu.core_type<tc>, window_params = [{transform_indices = @transform_0, window_bounds = array<i64: 120, 32>}, {pipeline_mode = #tpu.pipeline_mode<synchronous>, transform_indices = @transform_1, window_bounds = array<i64: 16, 32>}, {pipeline_mode = #tpu.pipeline_mode<synchronous>, transform_indices = @transform_2, window_bounds = array<i64: 1, 16>}, {transform_indices = @transform_3, window_bounds = array<i64: 120, 16>}]} {
    %c0 = arith.constant 0 : index
    %c0_0 = arith.constant 0 : index
    %0 = vector.load %arg1[%c0, %c0_0] : memref<120x32xf32, #tpu.memory_space<vmem>>, vector<120x32xf32>
    %c0_1 = arith.constant 0 : index
    %c0_2 = arith.constant 0 : index
    %1 = vector.load %arg2[%c0_1, %c0_2] : memref<16x32xf32, #tpu.memory_space<vmem>>, vector<16x32xf32>
    %cst = arith.constant dense<0.000000e+00> : vector<120x16xf32>
    %2 = tpu.matmul %0, %1, %cst {dimension_numbers = #tpu.dot_dimension_numbers<[1], [1], [0], [0], [0, 0, 1, 0], [], []>} : vector<120x32xf32>, vector<16x32xf32>, vector<120x16xf32> -> vector<120x16xf32>
    %c0_3 = arith.constant 0 : index
    %c0_4 = arith.constant 0 : index
    %3 = vector.load %arg3[%c0_3, %c0_4] : memref<1x16xf32, #tpu.memory_space<vmem>>, vector<1x16xf32>
    %4 = vector.broadcast %3 : vector<1x16xf32> to vector<120x16xf32>
    %5 = arith.addf %2, %4 : vector<120x16xf32>
    %c0_5 = arith.constant 0 : index
    %c0_6 = arith.constant 0 : index
    %6 = vector.load %arg4[%c0_5, %c0_6] : memref<120x16xf32, #tpu.memory_space<vmem>>, vector<120x16xf32>
    tpu.vector_store %arg4[%c0_5, %c0_6], %5 {strides = array<i32>} : memref<120x16xf32, #tpu.memory_space<vmem>>, vector<120x16xf32>,
    return
  }
  func.func @transform_0(%arg0: i32) -> (i32, i32) {
    %c0_i32 = arith.constant 0 : i32
    %c0_i32_0 = arith.constant 0 : i32
    return %arg0, %c0_i32 : i32, i32
  }
  func.func @transform_1(%arg0: i32) -> (i32, i32) {
    %c0_i32 = arith.constant 0 : i32
    %c0_i32_0 = arith.constant 0 : i32
    %c0_i32_1 = arith.constant 0 : i32
    return %c0_i32, %c0_i32_0 : i32, i32
  }
  func.func @transform_2(%arg0: i32) -> (i32, i32) {
    %c0_i32 = arith.constant 0 : i32
    %c0_i32_0 = arith.constant 0 : i32
    %c0_i32_1 = arith.constant 0 : i32
    return %c0_i32, %c0_i32_0 : i32, i32
  }
  func.func @transform_3(%arg0: i32) -> (i32, i32) {
    %c0_i32 = arith.constant 0 : i32
    %c0_i32_0 = arith.constant 0 : i32
    return %arg0, %c0_i32 : i32, i32
  }
}

</mosaic_0001>

<llo_original>
// kernel: tpu_custom_call.1
$region0: #{tpu_custom_call.1}
  #allocation0 [shape = 'u32[]', space=smem, size = 0x4, offset = 0x4, fixed_abs, tag = 'smem constant byte address 0x4 - core index']
  #allocation1 [shape = 'u32[144,128]{1,0:T(1,128)}', space=vmem, size = 0x12000, scoped, tag = 'internal scratch']
  %s0 = inlined_call_operand.vmem [shape: f32[120,32], index: 0, kind: input, shape index: {}]
  %s1 = inlined_call_operand.vmem [shape: f32[16,32], index: 1, kind: input, shape index: {}]
  %s2 = inlined_call_operand.vmem [shape: f32[1,16], index: 2, kind: input, shape index: {}]
  %s3 = inlined_call_operand.vmem [shape: f32[120,16], index: 3, kind: output, shape index: {}]
  %s4 = sld [smem:[#allocation0]]
  $region22: #{tpu_custom_call.1} parent=0
    _
  %s6 = ssub.s32 1, %s4
  %s7 = scalar_select 0, %s6, %s4
  // Predicated region
  $region2: #{tpu_custom_call.1} parent=0 // pred_check
    _
  $region3: #{tpu_custom_call.1} parent=0 // pred_check_branch
    %9 = sbr.rel (0) target = $region5
  $region4: #{tpu_custom_call.1} parent=0 // pred_region
    _
  $region5: #{tpu_custom_call.1} parent=0 // pred_fallthru
    _
  // Predicated region
  $region6: #{tpu_custom_call.1} parent=0 // pred_check
    _
  $region7: #{tpu_custom_call.1} parent=0 // pred_check_branch
    %11 = sbr.rel (0) target = $region9
  $region8: #{tpu_custom_call.1} parent=0 // pred_region
    _
  $region9: #{tpu_custom_call.1} parent=0 // pred_fallthru
    _
  // Predicated region
  $region10: #{tpu_custom_call.1} parent=0 // pred_check
    _
  $region11: #{tpu_custom_call.1} parent=0 // pred_check_branch
    %13 = sbr.rel (0) target = $region13
  $region12: #{tpu_custom_call.1} parent=0 // pred_region
    _
  $region13: #{tpu_custom_call.1} parent=0 // pred_fallthru
    _
  %v14 = vld [vmem:[%s0] sm:$0xff]
  %v15 = vld [vmem:[%s0 + $0x8] sm:$0xff]
  %v16 = vld [vmem:[%s0 + $0x10] sm:$0xff]
  %v17 = vld [vmem:[%s0 + $0x18] sm:$0xff]
  %v18 = vld [vmem:[%s0 + $0x20] sm:$0xff]
  %v19 = vld [vmem:[%s0 + $0x28] sm:$0xff]
  %v20 = vld [vmem:[%s0 + $0x30] sm:$0xff]
  %v21 = vld [vmem:[%s0 + $0x38] sm:$0xff]
  %v22 = vld [vmem:[%s0 + $0x40] sm:$0xff]
  %v23 = vld [vmem:[%s0 + $0x48] sm:$0xff]
  %v24 = vld [vmem:[%s0 + $0x50] sm:$0xff]
  %v25 = vld [vmem:[%s0 + $0x58] sm:$0xff]
  %v26 = vld [vmem:[%s0 + $0x60] sm:$0xff]
  %v27 = vld [vmem:[%s0 + $0x68] sm:$0xff]
  %v28 = vld [vmem:[%s0 + $0x70] sm:$0xff]
  %v29 = vld [vmem:[%s1] sm:$0xff]
  %v30 = vld [vmem:[%s1 + $0x8] sm:$0xff]
  %v31 = vld [vmem:[%s2] sm:$0x1]
  %v33 = vlaneseq
  %v34 = vshrl.u32 %v33, 7
  %v35 = vsub.s32 0, %v34
  %v36 = vrot.slane %v31, %v35
  %vm38 = vcmask 261120
  %v40 = vsel %vm38, %v14, 0
  %v43 = vsel %vm38, %v15, 0
  %v46 = vsel %vm38, %v16, 0
  %v49 = vsel %vm38, %v17, 0
  %v52 = vsel %vm38, %v18, 0
  %v55 = vsel %vm38, %v19, 0
  %v58 = vsel %vm38, %v20, 0
  %v61 = vsel %vm38, %v21, 0
  %v64 = vsel %vm38, %v22, 0
  %v67 = vsel %vm38, %v23, 0
  %v70 = vsel %vm38, %v24, 0
  %v73 = vsel %vm38, %v25, 0
  %v76 = vsel %vm38, %v26, 0
  %v79 = vsel %vm38, %v27, 0
  %v82 = vsel %vm38, %v28, 0
  %v85 = vsel %vm38, %v29, 0
  %v88 = vsel %vm38, %v30, 0
  %90 = vmatprep.subr.mxu0 0.0
  %91 = vmatpush1.xpose.msra.mxu0 0.0
  %92 = vmatprep.subr.mxu0 0.0
  %93 = vmatpush1.xpose.msra.mxu0 0.0
  %94 = vmatprep.subr.mxu0 0.0
  %95 = vmatpush1.xpose.msra.mxu0 0.0
  %96 = vmatprep.subr.mxu0 0.0
  %97 = vmatpush1.xpose.msra.mxu0 0.0
  %98 = vmatprep.subr.mxu0 0.0
  %99 = vmatpush1.xpose.msra.mxu0 0.0
  %100 = vmatprep.subr.mxu0 0.0
  %101 = vmatpush1.xpose.msra.mxu0 0.0
  %102 = vmatprep.subr.mxu0 0.0
  %103 = vmatpush1.xpose.msra.mxu0 0.0
  %104 = vmatprep.subr.mxu0 0.0
  %105 = vmatpush1.xpose.msra.mxu0 0.0
  %106 = vmatprep.subr.mxu0 0.0
  %107 = vmatpush1.xpose.msra.mxu0 0.0
  %108 = vmatprep.subr.mxu0 0.0
  %109 = vmatpush1.xpose.msra.mxu0 0.0
  %110 = vmatprep.subr.mxu0 0.0
  %111 = vmatpush1.xpose.msra.mxu0 0.0
  %112 = vmatprep.subr.mxu0 0.0
  %113 = vmatpush1.xpose.msra.mxu0 0.0
  %114 = vmatprep.subr.mxu0 0.0
  %115 = vmatpush1.xpose.msra.mxu0 0.0
  %116 = vmatprep.subr.mxu0 0.0
  %117 = vmatpush1.xpose.msra.mxu0 0.0
  %118 = vmatprep.subr.mxu0 0.0
  %119 = vmatpush1.xpose.msra.mxu0 %v88
  %120 = vmatprep.subr.mxu0 0.0
  %121 = vmatpush1.xpose.msra.mxu0 %v85
  %122 = vmatprep.subr.mxu0 0.0
  %123 = vmatpush2.xpose.msra.mxu0 0.0
  %124 = vmatprep.subr.mxu0 0.0
  %125 = vmatpush2.xpose.msra.mxu0 0.0
  %126 = vmatprep.subr.mxu0 0.0
  %127 = vmatpush2.xpose.msra.mxu0 0.0
  %128 = vmatprep.subr.mxu0 0.0
  %129 = vmatpush2.xpose.msra.mxu0 0.0
  %130 = vmatprep.subr.mxu0 0.0
  %131 = vmatpush2.xpose.msra.mxu0 0.0
  %132 = vmatprep.subr.mxu0 0.0
  %133 = vmatpush2.xpose.msra.mxu0 0.0
  %134 = vmatprep.subr.mxu0 0.0
  %135 = vmatpush2.xpose.msra.mxu0 0.0
  %136 = vmatprep.subr.mxu0 0.0
  %137 = vmatpush2.xpose.msra.mxu0 0.0
  %138 = vmatprep.subr.mxu0 0.0
  %139 = vmatpush2.xpose.msra.mxu0 0.0
  %140 = vmatprep.subr.mxu0 0.0
  %141 = vmatpush2.xpose.msra.mxu0 0.0
  %142 = vmatprep.subr.mxu0 0.0
  %143 = vmatpush2.xpose.msra.mxu0 0.0
  %144 = vmatprep.subr.mxu0 0.0
  %145 = vmatpush2.xpose.msra.mxu0 0.0
  %146 = vmatprep.subr.mxu0 0.0
  %147 = vmatpush2.xpose.msra.mxu0 0.0
  %148 = vmatprep.subr.mxu0 0.0
  %149 = vmatpush2.xpose.msra.mxu0 0.0
  %150 = vmatprep.subr.mxu0 0.0
  %151 = vmatpush2.xpose.msra.mxu0 0.0
  %152 = vmatprep.subr.mxu0 0.0
  %153 = vmatpush2.xpose.msra.mxu0 0.0
  %154 = vmatprep.mubr.f32.mxu0 0.0
  %155 = vmatmul.mubr.f32.gmra.mxu0 %v40
  %v156 = vpop.f32.mrf.mxu0
  %v157 = vadd.f32 %v36, %v156
  %v158 = vpop.f32.mrf.mxu0
  %159 = vmatprep.mubr.f32.mxu0 0.0
  %160 = vmatmul.mubr.f32.gmra.mxu0 %v43
  %v161 = vpop.f32.mrf.mxu0
  %v162 = vadd.f32 %v36, %v161
  %v163 = vpop.f32.mrf.mxu0
  %164 = vmatprep.mubr.f32.mxu0 0.0
  %165 = vmatmul.mubr.f32.gmra.mxu0 %v46
  %v166 = vpop.f32.mrf.mxu0
  %v167 = vadd.f32 %v36, %v166
  %v168 = vpop.f32.mrf.mxu0
  %169 = vmatprep.mubr.f32.mxu0 0.0
  %170 = vmatmul.mubr.f32.gmra.mxu0 %v49
  %v171 = vpop.f32.mrf.mxu0
  %v172 = vadd.f32 %v36, %v171
  %v173 = vpop.f32.mrf.mxu0
  %174 = vmatprep.mubr.f32.mxu0 0.0
  %175 = vmatmul.mubr.f32.gmra.mxu0 %v52
  %v176 = vpop.f32.mrf.mxu0
  %v177 = vadd.f32 %v36, %v176
  %v178 = vpop.f32.mrf.mxu0
  %179 = vmatprep.mubr.f32.mxu0 0.0
  %180 = vmatmul.mubr.f32.gmra.mxu0 %v55
  %v181 = vpop.f32.mrf.mxu0
  %v182 = vadd.f32 %v36, %v181
  %v183 = vpop.f32.mrf.mxu0
  %184 = vmatprep.mubr.f32.mxu0 0.0
  %185 = vmatmul.mubr.f32.gmra.mxu0 %v58
  %v186 = vpop.f32.mrf.mxu0
  %v187 = vadd.f32 %v36, %v186
  %v188 = vpop.f32.mrf.mxu0
  %189 = vmatprep.mubr.f32.mxu0 0.0
  %190 = vmatmul.mubr.f32.gmra.mxu0 %v61
  %v191 = vpop.f32.mrf.mxu0
  %v192 = vadd.f32 %v36, %v191
  %v193 = vpop.f32.mrf.mxu0
  %194 = vmatprep.mubr.f32.mxu0 0.0
  %195 = vmatmul.mubr.f32.gmra.mxu0 %v64
  %v196 = vpop.f32.mrf.mxu0
  %v197 = vadd.f32 %v36, %v196
  %v198 = vpop.f32.mrf.mxu0
  %199 = vmatprep.mubr.f32.mxu0 0.0
  %200 = vmatmul.mubr.f32.gmra.mxu0 %v67
  %v201 = vpop.f32.mrf.mxu0
  %v202 = vadd.f32 %v36, %v201
  %v203 = vpop.f32.mrf.mxu0
  %204 = vmatprep.mubr.f32.mxu0 0.0
  %205 = vmatmul.mubr.f32.gmra.mxu0 %v70
  %v206 = vpop.f32.mrf.mxu0
  %v207 = vadd.f32 %v36, %v206
  %v208 = vpop.f32.mrf.mxu0
  %209 = vmatprep.mubr.f32.mxu0 0.0
  %210 = vmatmul.mubr.f32.gmra.mxu0 %v73
  %v211 = vpop.f32.mrf.mxu0
  %v212 = vadd.f32 %v36, %v211
  %v213 = vpop.f32.mrf.mxu0
  %214 = vmatprep.mubr.f32.mxu0 0.0
  %215 = vmatmul.mubr.f32.gmra.mxu0 %v76
  %v216 = vpop.f32.mrf.mxu0
  %v217 = vadd.f32 %v36, %v216
  %v218 = vpop.f32.mrf.mxu0
  %219 = vmatprep.mubr.f32.mxu0 0.0
  %220 = vmatmul.mubr.f32.gmra.mxu0 %v79
  %v221 = vpop.f32.mrf.mxu0
  %v222 = vadd.f32 %v36, %v221
  %v223 = vpop.f32.mrf.mxu0
  %224 = vmatprep.mubr.f32.mxu0 0.0
  %225 = vmatmul.mubr.f32.gmra.mxu0 %v82
  %v226 = vpop.f32.mrf.mxu0
  %v227 = vadd.f32 %v36, %v226
  %v228 = vpop.f32.mrf.mxu0
  %229 = vdwg.mxu0
  %vm230 = vcmask 130048
  %231 = vst.msk [vmem:[%s3] sm:$0xff] %vm230, %v157
  %232 = vst.msk [vmem:[%s3 + $0x8] sm:$0xff] %vm230, %v162
  %233 = vst.msk [vmem:[%s3 + $0x10] sm:$0xff] %vm230, %v167
  %234 = vst.msk [vmem:[%s3 + $0x18] sm:$0xff] %vm230, %v172
  %235 = vst.msk [vmem:[%s3 + $0x20] sm:$0xff] %vm230, %v177
  %236 = vst.msk [vmem:[%s3 + $0x28] sm:$0xff] %vm230, %v182
  %237 = vst.msk [vmem:[%s3 + $0x30] sm:$0xff] %vm230, %v187
  %238 = vst.msk [vmem:[%s3 + $0x38] sm:$0xff] %vm230, %v192
  %239 = vst.msk [vmem:[%s3 + $0x40] sm:$0xff] %vm230, %v197
  %240 = vst.msk [vmem:[%s3 + $0x48] sm:$0xff] %vm230, %v202
  %241 = vst.msk [vmem:[%s3 + $0x50] sm:$0xff] %vm230, %v207
  %242 = vst.msk [vmem:[%s3 + $0x58] sm:$0xff] %vm230, %v212
  %243 = vst.msk [vmem:[%s3 + $0x60] sm:$0xff] %vm230, %v217
  %244 = vst.msk [vmem:[%s3 + $0x68] sm:$0xff] %vm230, %v222
  %245 = vst.msk [vmem:[%s3 + $0x70] sm:$0xff] %vm230, %v227
  // Predicated region
  $region14: #{tpu_custom_call.1} parent=0 // pred_check
    _
  $region15: #{tpu_custom_call.1} parent=0 // pred_check_branch
    %247 = sbr.rel (0) target = $region17
  $region16: #{tpu_custom_call.1} parent=0 // pred_region
    _
  $region17: #{tpu_custom_call.1} parent=0 // pred_fallthru
    _
  // Predicated region
  $region18: #{tpu_custom_call.1} parent=0 // pred_check
    _
  $region19: #{tpu_custom_call.1} parent=0 // pred_check_branch
    %249 = sbr.rel (0) target = $region21
  $region20: #{tpu_custom_call.1} parent=0 // pred_region
    _
  $region21: #{tpu_custom_call.1} parent=0 // pred_fallthru
    _

</llo_original>
